<compile_context>
chip_gen: v6e
topology: v6e:2x2x1
jax: 0.10.0
libtpu: 0.0.40
codegen_flags: <defaults>
</compile_context>

<pallas_src>
import functools

import jax
import jax.numpy as jnp
from jax import lax
from jax.experimental import pallas as pl
from jax.experimental.pallas import tpu as pltpu


# ---------------------------------------------------------------------------
# Kernel
# ---------------------------------------------------------------------------
def _channel_attention_kernel(x_ref, w1t_ref, w2t_ref, o_ref, acc_sc,
                              *, hw_total, sub_chunk):
    """One (batch-block, hw-block) grid step.

    x_ref  : (Bt, C, hw_blk)  feature slab (channels on sublanes, spatial on lanes)
    w1t_ref: (C, C//16)       fc1 weight, transposed
    w2t_ref: (C//16, C)       fc2 weight, transposed
    o_ref  : (Bt, 1, C)       sigmoid channel attention (lane-dense)
    acc_sc : (2*Bt, C) f32    rows [0:Bt]  -> running sum  (AdaptiveAvgPool2d(1))
                              rows [Bt:2Bt]-> running max  (AdaptiveMaxPool2d(1))
    """
    k = pl.program_id(1)
    bt, _, cc = o_ref.shape
    hw_blk = x_ref.shape[-1]

    @pl.when(k == 0)
    def _init():
        acc_sc[pl.ds(0, bt), :] = jnp.zeros((bt, cc), jnp.float32)
        acc_sc[pl.ds(bt, bt), :] = jnp.full((bt, cc), -jnp.inf, jnp.float32)

    # Single-pass fused sum+max over lane-aligned sub-chunks; the per-chunk f32
    # upcast keeps the in-register temporary small (no block-sized f32 copy),
    # which is what lets hw_blk grow toward the VMEM budget.
    n_sub = hw_blk // sub_chunk

    def body(i, carry):
        s, m = carry
        off = pl.multiple_of(i * sub_chunk, sub_chunk)
        c = x_ref[:, :, pl.ds(off, sub_chunk)].astype(jnp.float32)  # (Bt, C, sub)
        return s + jnp.sum(c, axis=-1), jnp.maximum(m, jnp.max(c, axis=-1))

    s0 = jnp.zeros((bt, cc), jnp.float32)
    m0 = jnp.full((bt, cc), -jnp.inf, jnp.float32)
    s, m = lax.fori_loop(0, n_sub, body, (s0, m0), unroll=True)

    acc_sc[pl.ds(0, bt), :] = acc_sc[pl.ds(0, bt), :] + s
    acc_sc[pl.ds(bt, bt), :] = jnp.maximum(acc_sc[pl.ds(bt, bt), :], m)

    @pl.when(k == pl.num_programs(1) - 1)
    def _finalize():
        # Scale the sum rows in place -> avg pool. The scratch already IS the
        # stacked (2*Bt, C) operand, so no concatenate/relayout in the epilogue.
        acc_sc[pl.ds(0, bt), :] = acc_sc[pl.ds(0, bt), :] * (1.0 / float(hw_total))
        p = acc_sc[...]                                              # (2*Bt, C)

        # Fused shared MLP: one fc1/fc2 matmul pair covers both pooled branches.
        h = jnp.dot(p, w1t_ref[...], preferred_element_type=jnp.float32)
        h = jnp.maximum(h, 0.0)                                      # ReLU
        out = jnp.dot(h, w2t_ref[...], preferred_element_type=jnp.float32)

        v = out[:bt] + out[bt:]                                      # avg_out + max_out
        # numerically-stable sigmoid: sigmoid(v) = 0.5 * (tanh(v/2) + 1)
        att = 0.5 * (jnp.tanh(0.5 * v) + 1.0)                        # (Bt, C)
        o_ref[...] = att.reshape(o_ref.shape).astype(o_ref.dtype)


# ---------------------------------------------------------------------------
# Host-side tiling helpers
# ---------------------------------------------------------------------------
def _tpu_vmem_and_cores():
    """(physical VMEM bytes, #TensorCores) with conservative fallbacks."""
    vmem = 64 * 1024 * 1024          # v7x physical (smallest current gen)
    cores = 1
    try:
        info = pltpu.get_tpu_info()
        v = getattr(info, "vmem_capacity_bytes", None)
        if v:
            vmem = int(v)
        for attr in ("num_cores", "core_count", "num_tensorcores",
                     "tensorcore_count"):
            c = getattr(info, attr, None)
            if c:
                cores = max(1, int(c))
                break
    except Exception:
        pass
    return vmem, cores


def _divisors(n):
    return [d for d in range(1, n + 1) if n % d == 0]


def _pick_blocks(B, C, HW, itemsize, n_buf, budget_bytes, batch_block, hw_block,
                 num_cores):
    """Pick (batch_block, hw_block) so the n_buf-deep pipelined x block fits the
    VMEM budget. hw_block must divide HW and be lane-aligned (x128) or == HW."""
    if hw_block is not None:
        hw_cands = [hw_block]
    else:
        hw_cands = sorted({d for d in _divisors(HW) if d % 128 == 0} | {HW},
                          reverse=True)

    def fits(bb, hw):
        return n_buf * bb * C * hw * itemsize <= budget_bytes

    if batch_block is not None:
        bb_cands = [batch_block]
    else:
        # Multi-TC chips: keep >= num_cores batch blocks so the "parallel"
        # axis shards across cores. Single-TC chips: one big batch block
        # (grid steps there are just a serial loop + ~0.35us each).
        bb_max = B if num_cores <= 1 else max(1, B // num_cores)
        bb_cands = sorted([d for d in _divisors(B) if d <= bb_max],
                          reverse=True) or [1]

    for bb in bb_cands:
        for hw in hw_cands:
            if fits(bb, hw):
                return bb, hw
    # Nothing fits (e.g. HW has no 128-multiple divisor and C is huge):
    # best effort - smallest batch block, smallest legal hw block; the raised
    # scoped-VMEM limit below still lets realistic backbone shapes compile.
    return bb_cands[-1], hw_cands[-1]


def _pick_sub_chunk(bb, C, hw_block, target_bytes=1 << 20):
    """Largest lane-aligned divisor of hw_block whose f32 upcast temp is small."""
    best = hw_block
    for s in (512, 384, 256, 128):
        if hw_block % s == 0:
            best = s
            if bb * C * s * 4 <= target_bytes:
                return s
    return best


# ---------------------------------------------------------------------------
# Wrapper
# ---------------------------------------------------------------------------
def channel_attention(x_nchw, fc1_w, fc2_w, *, batch_block=None, hw_block=None,
                      input_buffers=2, vmem_budget_bytes=None):
    """ChannelAttention forward.

    x_nchw: (B, C, H, W) feature map (f32 or bf16 - feed bf16 if available)
    fc1_w : (C//16, C)   fc1 (1x1 conv) weight, squeezed
    fc2_w : (C, C//16)   fc2 (1x1 conv) weight, squeezed
    Returns (B, C, 1, 1) sigmoid attention, dtype of x.
    """
    B, C, H, W = x_nchw.shape
    HW = H * W
    hidden = fc1_w.shape[0]
    assert fc1_w.shape == (hidden, C) and fc2_w.shape == (C, hidden)

    # Stream x in its native dtype (no host-side upcast); kernel upcasts per
    # sub-chunk in-register.
    x = x_nchw.reshape(B, C, HW)
    # Host-side transposes so in-kernel matmuls are lane-dense (rows, C) forms.
    w1t = jnp.asarray(fc1_w, jnp.float32).T            # (C, hidden)
    w2t = jnp.asarray(fc2_w, jnp.float32).T            # (hidden, C)

    vmem_phys, num_cores = _tpu_vmem_and_cores()
    if vmem_budget_bytes is None:
        # ~1/5 of physical VMEM for the pipelined x buffers: multi-MiB DMA
        # tiles (85%+ HBM roofline regime) on v5e/v6e (128 MiB) while leaving
        # headroom for weights/output/scratch/temps under v7x's 64 MiB.
        vmem_budget_bytes = vmem_phys // 5

    bb, hw_blk = _pick_blocks(B, C, HW, x.dtype.itemsize, input_buffers,
                              vmem_budget_bytes, batch_block, hw_block,
                              num_cores)
    assert B % bb == 0, "batch_block must divide B"
    assert HW % hw_blk == 0 and (hw_blk == HW or hw_blk % 128 == 0), \
        "hw_block must divide H*W and be lane-aligned (x128) or the full H*W"

    nb = B // bb
    nk = HW // hw_blk
    sub = _pick_sub_chunk(bb, C, hw_blk)

    kernel = functools.partial(_channel_attention_kernel,
                               hw_total=HW, sub_chunk=sub)

    x_spec_kwargs = {}
    if input_buffers != 2:                               # optional 3-deep pipeline
        x_spec_kwargs["pipeline_mode"] = pl.Buffered(input_buffers)

    out_itemsize = jnp.dtype(x_nchw.dtype).itemsize
    cost = pl.CostEstimate(
        flops=2 * B * C * HW + 8 * B * C * hidden,
        transcendentals=B * C,
        bytes_accessed=(B * C * HW * x.dtype.itemsize
                        + 2 * C * hidden * 4
                        + B * C * out_itemsize),
    )

    out = pl.pallas_call(
        kernel,
        out_shape=jax.ShapeDtypeStruct((B, 1, C), x_nchw.dtype),
        grid_spec=pltpu.PrefetchScalarGridSpec(
            num_scalar_prefetch=0,
            grid=(nb, nk),                               # reduction axis last
            in_specs=[
                pl.BlockSpec((bb, C, hw_blk), lambda b, k: (b, 0, k),
                             **x_spec_kwargs),
                pl.BlockSpec((C, hidden), lambda b, k: (0, 0)),
                pl.BlockSpec((hidden, C), lambda b, k: (0, 0)),
            ],
            out_specs=pl.BlockSpec((bb, 1, C), lambda b, k: (b, 0, 0)),
            scratch_shapes=[
                pltpu.VMEM((2 * bb, C), jnp.float32),    # stacked [sum; max]
            ],
        ),
        compiler_params=pltpu.CompilerParams(
            dimension_semantics=("parallel", "arbitrary"),
            vmem_limit_bytes=int(vmem_phys * 3 // 4),
        ),
        cost_estimate=cost,
    )(x, w1t, w2t)

    return out.reshape(B, C, 1, 1)


# ---------------------------------------------------------------------------
# Pure-JAX reference (for verification)
# ---------------------------------------------------------------------------
def _reference(x, fc1_w, fc2_w):
    avg = x.mean(axis=(2, 3))                           # (B, C)
    mx = x.max(axis=(2, 3))                             # (B, C)

    def fc(v):
        return jnp.maximum(v @ fc1_w.T, 0.0) @ fc2_w.T

    out = fc(avg) + fc(mx)
    return jax.nn.sigmoid(out)[:, :, None, None]        # (B, C, 1, 1)


if __name__ == "__main__":
    key = jax.random.PRNGKey(0)
    kx, k1, k2 = jax.random.split(key, 3)

    # in_planes must be a multiple of 16 (module hard-codes C // 16).
    B, C, H, W = 2, 32, 16, 16
    x = jax.random.normal(kx, (B, C, H, W), jnp.float32)
    fc1_w = 0.01 * jax.random.normal(k1, (C // 16, C), jnp.float32)  # Conv2d(C, C//16, 1).weight
    fc2_w = 0.01 * jax.random.normal(k2, (C, C // 16), jnp.float32)  # Conv2d(C//16, C, 1).weight

    ref = jax.block_until_ready(_reference(x, fc1_w, fc2_w))

    checks = []
    # default (auto-picked blocks), f32 input
    checks.append(("f32 auto", channel_attention(x, fc1_w, fc2_w), 1e-3))
    # exercise the split HW reduction path (pl.when accumulation across k steps)
    checks.append(("f32 hw-split",
                   channel_attention(x, fc1_w, fc2_w, hw_block=(H * W) // 2),
                   1e-3))
    # bf16 streaming path (half HBM traffic; kernel upcasts in-register)
    checks.append(("bf16 auto",
                   channel_attention(x.astype(jnp.bfloat16), fc1_w, fc2_w),
                   2e-2))

    for name, got, tol in checks:
        got = jax.block_until_ready(got).astype(jnp.float32)
        if not bool(jnp.allclose(got, ref, atol=tol, rtol=tol)):
            err = float(jnp.max(jnp.abs(got - ref)))
            raise SystemExit(f"{name}: mismatch vs reference, max abs err = {err:e}")

    print("KERNEL_OK")
</pallas_src>

<mosaic_0001>
module attributes {stable_mosaic.version = 11 : i64} {
  func.func @_channel_attention_kernel(%arg0: i32, %arg1: i32, %arg2: memref<2x32x256xf32, #tpu.memory_space<vmem>>, %arg3: memref<32x2xf32, #tpu.memory_space<vmem>>, %arg4: memref<2x32xf32, #tpu.memory_space<vmem>>, %arg5: memref<2x1x32xf32, #tpu.memory_space<vmem>>, %arg6: memref<4x32xf32, #tpu.memory_space<vmem>>) attributes {dimension_semantics = [#tpu.dimension_semantics<parallel>, #tpu.dimension_semantics<arbitrary>], iteration_bounds = array<i64: 1, 1>, scalar_prefetch = 0 : i64, scratch_operands = 1 : i64, tpu.core_type = #tpu.core_type<tc>, window_params = [{transform_indices = @transform_0, window_bounds = array<i64: 2, 32, 256>}, {pipeline_mode = #tpu.pipeline_mode<synchronous>, transform_indices = @transform_1, window_bounds = array<i64: 32, 2>}, {pipeline_mode = #tpu.pipeline_mode<synchronous>, transform_indices = @transform_2, window_bounds = array<i64: 2, 32>}, {transform_indices = @transform_3, window_bounds = array<i64: 2, 1, 32>}]} {
    %c0_i32 = arith.constant 0 : i32
    %0 = arith.cmpi eq, %arg1, %c0_i32 : i32
    %1 = arith.extui %0 : i1 to i32
    %c0_i32_0 = arith.constant 0 : i32
    %2 = arith.cmpi ne, %1, %c0_i32_0 : i32
    scf.if %2 {
      %cst_15 = arith.constant 0.000000e+00 : f32
      %22 = vector.broadcast %cst_15 : f32 to vector<2x32xf32>
      %c0_16 = arith.constant 0 : index
      %c0_17 = arith.constant 0 : index
      %23 = vector.load %arg6[%c0_16, %c0_17] : memref<4x32xf32, #tpu.memory_space<vmem>>, vector<2x32xf32>
      tpu.vector_store %arg6[%c0_16, %c0_17], %22 {strides = array<i32>} : memref<4x32xf32, #tpu.memory_space<vmem>>, vector<2x32xf32>,
      %cst_18 = arith.constant 0xFF800000 : f32
      %24 = vector.broadcast %cst_18 : f32 to vector<2x32xf32>
      %c2_19 = arith.constant 2 : index
      %c0_20 = arith.constant 0 : index
      %25 = vector.load %arg6[%c2_19, %c0_20] : memref<4x32xf32, #tpu.memory_space<vmem>>, vector<2x32xf32>
      tpu.vector_store %arg6[%c2_19, %c0_20], %24 {strides = array<i32>} : memref<4x32xf32, #tpu.memory_space<vmem>>, vector<2x32xf32>,
    } else {
    }
    %cst = arith.constant 0.000000e+00 : f32
    %3 = vector.broadcast %cst : f32 to vector<2x32xf32>
    %cst_1 = arith.constant 0xFF800000 : f32
    %4 = vector.broadcast %cst_1 : f32 to vector<2x32xf32>
    %c0_i32_2 = arith.constant 0 : i32
    %c256_i32 = arith.constant 256 : i32
    %5 = arith.muli %c0_i32_2, %c256_i32 : i32
    %6 = tpu.assume_multiple %5, 256 : i32
    %c0 = arith.constant 0 : index
    %c0_3 = arith.constant 0 : index
    %7 = arith.index_cast %6 : i32 to index
    %8 = vector.load %arg2[%c0, %c0_3, %7] : memref<2x32x256xf32, #tpu.memory_space<vmem>>, vector<2x32x256xf32>
    %cst_4 = arith.constant dense<0.000000e+00> : vector<2x32xf32>
    %9 = vector.multi_reduction <add>, %8, %cst_4 [2] : vector<2x32x256xf32> to vector<2x32xf32>
    %10 = arith.addf %3, %9 : vector<2x32xf32>
    %cst_5 = arith.constant dense<0xFF800000> : vector<2x32xf32>
    %11 = vector.multi_reduction <maximumf>, %8, %cst_5 [2] : vector<2x32x256xf32> to vector<2x32xf32>
    %12 = arith.maximumf %4, %11 : vector<2x32xf32>
    %c1_i32 = arith.constant 1 : i32
    %c0_6 = arith.constant 0 : index
    %c0_7 = arith.constant 0 : index
    %13 = vector.load %arg6[%c0_6, %c0_7] : memref<4x32xf32, #tpu.memory_space<vmem>>, vector<2x32xf32>
    %14 = arith.addf %13, %10 : vector<2x32xf32>
    %c0_8 = arith.constant 0 : index
    %c0_9 = arith.constant 0 : index
    %15 = vector.load %arg6[%c0_8, %c0_9] : memref<4x32xf32, #tpu.memory_space<vmem>>, vector<2x32xf32>
    tpu.vector_store %arg6[%c0_8, %c0_9], %14 {strides = array<i32>} : memref<4x32xf32, #tpu.memory_space<vmem>>, vector<2x32xf32>,
    %c2 = arith.constant 2 : index
    %c0_10 = arith.constant 0 : index
    %16 = vector.load %arg6[%c2, %c0_10] : memref<4x32xf32, #tpu.memory_space<vmem>>, vector<2x32xf32>
    %17 = arith.maximumf %16, %12 : vector<2x32xf32>
    %c2_11 = arith.constant 2 : index
    %c0_12 = arith.constant 0 : index
    %18 = vector.load %arg6[%c2_11, %c0_12] : memref<4x32xf32, #tpu.memory_space<vmem>>, vector<2x32xf32>
    tpu.vector_store %arg6[%c2_11, %c0_12], %17 {strides = array<i32>} : memref<4x32xf32, #tpu.memory_space<vmem>>, vector<2x32xf32>,
    %c0_i32_13 = arith.constant 0 : i32
    %19 = arith.cmpi eq, %arg1, %c0_i32_13 : i32
    %20 = arith.extui %19 : i1 to i32
    %c0_i32_14 = arith.constant 0 : i32
    %21 = arith.cmpi ne, %20, %c0_i32_14 : i32
    scf.if %21 {
      %c0_15 = arith.constant 0 : index
      %c0_16 = arith.constant 0 : index
      %22 = vector.load %arg6[%c0_15, %c0_16] : memref<4x32xf32, #tpu.memory_space<vmem>>, vector<2x32xf32>
      %cst_17 = arith.constant 3.906250e-03 : f32
      %23 = vector.broadcast %cst_17 : f32 to vector<2x32xf32>
      %24 = arith.mulf %22, %23 : vector<2x32xf32>
      %c0_18 = arith.constant 0 : index
      %c0_19 = arith.constant 0 : index
      %25 = vector.load %arg6[%c0_18, %c0_19] : memref<4x32xf32, #tpu.memory_space<vmem>>, vector<2x32xf32>
      tpu.vector_store %arg6[%c0_18, %c0_19], %24 {strides = array<i32>} : memref<4x32xf32, #tpu.memory_space<vmem>>, vector<2x32xf32>,
      %c0_20 = arith.constant 0 : index
      %c0_21 = arith.constant 0 : index
      %26 = vector.load %arg6[%c0_20, %c0_21] : memref<4x32xf32, #tpu.memory_space<vmem>>, vector<4x32xf32>
      %c0_22 = arith.constant 0 : index
      %c0_23 = arith.constant 0 : index
      %27 = vector.load %arg3[%c0_22, %c0_23] : memref<32x2xf32, #tpu.memory_space<vmem>>, vector<32x2xf32>
      %cst_24 = arith.constant dense<0.000000e+00> : vector<4x2xf32>
      %28 = tpu.matmul %26, %27, %cst_24 {dimension_numbers = #tpu.dot_dimension_numbers<[1], [0], [0], [1], [0, 0, 1, 1], [], []>} : vector<4x32xf32>, vector<32x2xf32>, vector<4x2xf32> -> vector<4x2xf32>
      %cst_25 = arith.constant 0.000000e+00 : f32
      %29 = vector.broadcast %cst_25 : f32 to vector<4x2xf32>
      %30 = arith.maximumf %28, %29 : vector<4x2xf32>
      %c0_26 = arith.constant 0 : index
      %c0_27 = arith.constant 0 : index
      %31 = vector.load %arg4[%c0_26, %c0_27] : memref<2x32xf32, #tpu.memory_space<vmem>>, vector<2x32xf32>
      %cst_28 = arith.constant dense<0.000000e+00> : vector<4x32xf32>
      %32 = tpu.matmul %30, %31, %cst_28 {dimension_numbers = #tpu.dot_dimension_numbers<[1], [0], [0], [1], [0, 0, 1, 1], [], []>} : vector<4x2xf32>, vector<2x32xf32>, vector<4x32xf32> -> vector<4x32xf32>
      %33 = vector.extract_strided_slice %32 {offsets = [0, 0], sizes = [2, 32], strides = [1, 1]} : vector<4x32xf32> to vector<2x32xf32>
      %34 = vector.extract_strided_slice %32 {offsets = [2, 0], sizes = [2, 32], strides = [1, 1]} : vector<4x32xf32> to vector<2x32xf32>
      %35 = arith.addf %33, %34 : vector<2x32xf32>
      %cst_29 = arith.constant 5.000000e-01 : f32
      %36 = vector.broadcast %cst_29 : f32 to vector<2x32xf32>
      %37 = arith.mulf %36, %35 : vector<2x32xf32>
      %38 = math.tanh %37 : vector<2x32xf32>
      %cst_30 = arith.constant 1.000000e+00 : f32
      %39 = vector.broadcast %cst_30 : f32 to vector<2x32xf32>
      %40 = arith.addf %38, %39 : vector<2x32xf32>
      %cst_31 = arith.constant 5.000000e-01 : f32
      %41 = vector.broadcast %cst_31 : f32 to vector<2x32xf32>
      %42 = arith.mulf %41, %40 : vector<2x32xf32>
      %43 = vector.shape_cast %42 : vector<2x32xf32> to vector<2x1x32xf32>
      %c0_32 = arith.constant 0 : index
      %c0_33 = arith.constant 0 : index
      %c0_34 = arith.constant 0 : index
      %44 = vector.load %arg5[%c0_32, %c0_33, %c0_34] : memref<2x1x32xf32, #tpu.memory_space<vmem>>, vector<2x1x32xf32>
      tpu.vector_store %arg5[%c0_32, %c0_33, %c0_34], %43 {strides = array<i32>} : memref<2x1x32xf32, #tpu.memory_space<vmem>>, vector<2x1x32xf32>,
    } else {
    }
    return
  }
  func.func @transform_0(%arg0: i32, %arg1: i32) -> (i32, i32, i32) {
    %c0_i32 = arith.constant 0 : i32
    %c0_i32_0 = arith.constant 0 : i32
    return %arg0, %c0_i32, %arg1 : i32, i32, i32
  }
  func.func @transform_1(%arg0: i32, %arg1: i32) -> (i32, i32) {
    %c0_i32 = arith.constant 0 : i32
    %c0_i32_0 = arith.constant 0 : i32
    %c0_i32_1 = arith.constant 0 : i32
    return %c0_i32, %c0_i32_0 : i32, i32
  }
  func.func @transform_2(%arg0: i32, %arg1: i32) -> (i32, i32) {
    %c0_i32 = arith.constant 0 : i32
    %c0_i32_0 = arith.constant 0 : i32
    %c0_i32_1 = arith.constant 0 : i32
    return %c0_i32, %c0_i32_0 : i32, i32
  }
  func.func @transform_3(%arg0: i32, %arg1: i32) -> (i32, i32, i32) {
    %c0_i32 = arith.constant 0 : i32
    %c0_i32_0 = arith.constant 0 : i32
    %c0_i32_1 = arith.constant 0 : i32
    return %arg0, %c0_i32, %c0_i32_0 : i32, i32, i32
  }
}

</mosaic_0001>

<llo_original>
// kernel: tpu_custom_call.1
$region0: #{tpu_custom_call.1}
  #allocation0 [shape = 'u32[]', space=smem, size = 0x4, offset = 0x4, fixed_abs, tag = 'smem constant byte address 0x4 - core index']
  #allocation1 [shape = 'u32[144,128]{1,0:T(1,128)}', space=vmem, size = 0x12000, scoped, tag = 'internal scratch']
  #allocation2 [shape = 'f32[4,32]{1,0:T(4,128)}', space=vmem, size = 0x800, scoped, tag = 'scratch operand']
  %s0 = inlined_call_operand.hbm [shape: f32[2,32,256], index: 0, kind: input, shape index: {}]
  %s1 = inlined_call_operand.vmem [shape: f32[32,2], index: 1, kind: input, shape index: {}]
  %s2 = inlined_call_operand.vmem [shape: f32[2,32], index: 2, kind: input, shape index: {}]
  %s3 = inlined_call_operand.hbm [shape: f32[2,1,32], index: 3, kind: output, shape index: {}]
  %s4 = sld [smem:[#allocation0]]
  $region34: #{tpu_custom_call.1} parent=0
    _
  %s6 = ssub.s32 1, %s4
  %s7 = scalar_select 0, %s6, %s4
  $region1: #{tpu_custom_call.1} parent=0
    #allocation3 [shape = 'u8[65536]{0}', space=vmem, size = 0x10000, scoped, tag = 'input window, operand 0, single buffered']
    #allocation4 [shape = 's32[1]{0}', space=sflag, size = 0x4, scoped, tag = 'scoped memory for tpu_custom_call.1']
    #allocation5 [shape = 's32[1]{0}', space=sflag, size = 0x4, scoped, tag = 'scoped memory for tpu_custom_call.1']
    #allocation6 [shape = 'u8[1024]{0}', space=vmem, size = 0x400, scoped, tag = 'output window, operand 0, single buffered']
    %8 = vsyncpa [#allocation4], 0
    %9 = vsyncpa [#allocation5], 0
    // Predicated region
    $region2: #{tpu_custom_call.1} parent=1 // pred_check
      _
    $region3: #{tpu_custom_call.1} parent=1 // pred_check_branch
      %11 = sbr.rel (0) target = $region5
    $region4: #{tpu_custom_call.1} parent=1 // pred_region
      %s13 = ssub.s32 2048, 2048
      %14 = vsyncadd [#allocation4], %s13
      %s15 = sshll.u32 [#allocation3], 4
      %s16 = int_to_ptr.vmem [resolvable:$true] %s15
      %21 = dma.hbm_to_vmem [thread:$0]  %s0, 2048, %s16, [#allocation4], 256, 256, 16
    $region5: #{tpu_custom_call.1} parent=1 // pred_fallthru
      _
    // Predicated region
    $region6: #{tpu_custom_call.1} parent=1 // pred_check
      _
    $region7: #{tpu_custom_call.1} parent=1 // pred_check_branch
      %23 = sbr.rel (0) target = $region9
    $region8: #{tpu_custom_call.1} parent=1 // pred_region
      _
    $region9: #{tpu_custom_call.1} parent=1 // pred_fallthru
      _
    // Predicated region
    $region10: #{tpu_custom_call.1} parent=1 // pred_check
      _
    $region11: #{tpu_custom_call.1} parent=1 // pred_check_branch
      %25 = sbr.rel (0) target = $region13
    $region12: #{tpu_custom_call.1} parent=1 // pred_region
      _
    $region13: #{tpu_custom_call.1} parent=1 // pred_fallthru
      _
    // Predicated region
    $region14: #{tpu_custom_call.1} parent=1 // pred_check
      _
    $region15: #{tpu_custom_call.1} parent=1 // pred_check_branch
      %27 = sbr.rel (0) target = $region17
    $region16: #{tpu_custom_call.1} parent=1 // pred_region
      %28 = dma.done [#allocation4], 2048
    $region17: #{tpu_custom_call.1} parent=1 // pred_fallthru
      _
    %p29 = scmp.eq.s32.totalorder 0, 0
    // Predicated region
    $region18: #{tpu_custom_call.1} parent=1 // pred_check
      %p30 = pneg %p29
    $region19: #{tpu_custom_call.1} parent=1 // pred_check_branch
      %32 = sbr.rel (%p30) target = $region21
    $region20: #{tpu_custom_call.1} parent=1 // pred_region
      %vm33 = vcmask 254976
      %34 = vst.msk [vmem:[#allocation2] sm:$0x3] %vm33, 0.0
      %35 = vst.msk [vmem:[#allocation2 + $0x2] sm:$0x3] %vm33, -inf
    $region21: #{tpu_custom_call.1} parent=1 // pred_fallthru
      _
    %v36 = vld [vmem:[#allocation3] sm:$0xff]
    %v37 = vld [vmem:[#allocation3 + $0x8] sm:$0xff]
    %v38 = vld [vmem:[#allocation3 + $0x10] sm:$0xff]
    %v39 = vld [vmem:[#allocation3 + $0x18] sm:$0xff]
    %v40 = vld [vmem:[#allocation3 + $0x20] sm:$0xff]
    %v41 = vld [vmem:[#allocation3 + $0x28] sm:$0xff]
    %v42 = vld [vmem:[#allocation3 + $0x30] sm:$0xff]
    %v43 = vld [vmem:[#allocation3 + $0x38] sm:$0xff]
    %v44 = vld [vmem:[#allocation3 + $0x40] sm:$0xff]
    %v45 = vld [vmem:[#allocation3 + $0x48] sm:$0xff]
    %v46 = vld [vmem:[#allocation3 + $0x50] sm:$0xff]
    %v47 = vld [vmem:[#allocation3 + $0x58] sm:$0xff]
    %v48 = vld [vmem:[#allocation3 + $0x60] sm:$0xff]
    %v49 = vld [vmem:[#allocation3 + $0x68] sm:$0xff]
    %v50 = vld [vmem:[#allocation3 + $0x70] sm:$0xff]
    %v51 = vld [vmem:[#allocation3 + $0x78] sm:$0xff]
    %v52 = vadd.f32 %v36, %v37
    %53 = vadd.xlane.f32.xlu0 %v52
    %v54 = vpop.xlane.xlu0 %53
    %v55 = vadd.f32 %v38, %v39
    %56 = vadd.xlane.f32.xlu0 %v55
    %v57 = vpop.xlane.xlu0 %56
    %v58 = vadd.f32 %v40, %v41
    %59 = vadd.xlane.f32.xlu0 %v58
    %v60 = vpop.xlane.xlu0 %59
    %v61 = vadd.f32 %v42, %v43
    %62 = vadd.xlane.f32.xlu0 %v61
    %v63 = vpop.xlane.xlu0 %62
    %v64 = vadd.f32 %v44, %v45
    %65 = vadd.xlane.f32.xlu0 %v64
    %v66 = vpop.xlane.xlu0 %65
    %v67 = vadd.f32 %v46, %v47
    %68 = vadd.xlane.f32.xlu0 %v67
    %v69 = vpop.xlane.xlu0 %68
    %v70 = vadd.f32 %v48, %v49
    %71 = vadd.xlane.f32.xlu0 %v70
    %v72 = vpop.xlane.xlu0 %71
    %v73 = vadd.f32 %v50, %v51
    %74 = vadd.xlane.f32.xlu0 %v73
    %v75 = vpop.xlane.xlu0 %74
    %v76 = vadd.f32 %v54, 0.0
    %v77 = vadd.f32 %v57, 0.0
    %v78 = vadd.f32 %v60, 0.0
    %v79 = vadd.f32 %v63, 0.0
    %v80 = vadd.f32 %v66, 0.0
    %v81 = vadd.f32 %v69, 0.0
    %v82 = vadd.f32 %v72, 0.0
    %v83 = vadd.f32 %v75, 0.0
    %v84 = vmax.f32 %v36, %v37
    %85 = vmax.xlane.f32.xlu0 %v84
    %v86 = vpop.xlane.xlu0 %85
    %v87 = vmax.f32 %v38, %v39
    %88 = vmax.xlane.f32.xlu0 %v87
    %v89 = vpop.xlane.xlu0 %88
    %v90 = vmax.f32 %v40, %v41
    %91 = vmax.xlane.f32.xlu0 %v90
    %v92 = vpop.xlane.xlu0 %91
    %v93 = vmax.f32 %v42, %v43
    %94 = vmax.xlane.f32.xlu0 %v93
    %v95 = vpop.xlane.xlu0 %94
    %v96 = vmax.f32 %v44, %v45
    %97 = vmax.xlane.f32.xlu0 %v96
    %v98 = vpop.xlane.xlu0 %97
    %v99 = vmax.f32 %v46, %v47
    %100 = vmax.xlane.f32.xlu0 %v99
    %v101 = vpop.xlane.xlu0 %100
    %v102 = vmax.f32 %v48, %v49
    %103 = vmax.xlane.f32.xlu0 %v102
    %v104 = vpop.xlane.xlu0 %103
    %v105 = vmax.f32 %v50, %v51
    %106 = vmax.xlane.f32.xlu0 %v105
    %v107 = vpop.xlane.xlu0 %106
    %v108 = vld [vmem:[#allocation2] sm:$0x3]
    %v117 = vlaneseq
    %v118 = vand.u32 %v117, 127
    %v119 = vlaneseq
    %v120 = vshrl.u32 %v119, 7
    %v121 = vsub.s32 %v118, %v120
    %v122 = vrot.slane %v76, %v121
    %v123 = vadd.s32 %v118, 4294967288
    %v124 = vlaneseq
    %v125 = vshrl.u32 %v124, 7
    %v126 = vsub.s32 %v123, %v125
    %v127 = vrot.slane %v77, %v126
    %vm128 = vcmask 130112
    %v129 = vsel %vm128, %v127, %v122
    %v130 = vadd.s32 %v118, 4294967280
    %v131 = vlaneseq
    %v132 = vshrl.u32 %v131, 7
    %v133 = vsub.s32 %v130, %v132
    %v134 = vrot.slane %v78, %v133
    %vm135 = vcmask 195712
    %v136 = vsel %vm135, %v134, %v129
    %v137 = vadd.s32 %v118, 4294967272
    %v138 = vlaneseq
    %v139 = vshrl.u32 %v138, 7
    %v140 = vsub.s32 %v137, %v139
    %v141 = vrot.slane %v79, %v140
    %vm142 = vcmask 261312
    %v143 = vsel %vm142, %v141, %v136
    %v144 = vlaneseq
    %v145 = vshrl.u32 %v144, 7
    %v146 = vsub.s32 %v118, %v145
    %v147 = vrot.slane %v80, %v146
    %v148 = vlaneseq
    %v149 = vshrl.u32 %v148, 7
    %v150 = vsub.s32 %v123, %v149
    %v151 = vrot.slane %v81, %v150
    %v152 = vsel %vm128, %v151, %v147
    %v153 = vlaneseq
    %v154 = vshrl.u32 %v153, 7
    %v155 = vsub.s32 %v130, %v154
    %v156 = vrot.slane %v82, %v155
    %v157 = vsel %vm135, %v156, %v152
    %v158 = vlaneseq
    %v159 = vshrl.u32 %v158, 7
    %v160 = vsub.s32 %v137, %v159
    %v161 = vrot.slane %v83, %v160
    %v162 = vsel %vm142, %v161, %v157
    %vm163 = vcmask 1041409
    %v164 = vsel %vm163, %v162, %v143
    %v166 = vadd.f32 %v108, %v164
    %vm167 = vcmask 254976
    %168 = vst.msk [vmem:[#allocation2] sm:$0x3] %vm167, %v166
    %v169 = vld [vmem:[#allocation2 + $0x2] sm:$0x3]
    %v178 = vlaneseq
    %v179 = vshrl.u32 %v178, 7
    %v180 = vsub.s32 %v118, %v179
    %v181 = vrot.slane %v86, %v180
    %v182 = vlaneseq
    %v183 = vshrl.u32 %v182, 7
    %v184 = vsub.s32 %v123, %v183
    %v185 = vrot.slane %v89, %v184
    %v186 = vsel %vm128, %v185, %v181
    %v187 = vlaneseq
    %v188 = vshrl.u32 %v187, 7
    %v189 = vsub.s32 %v130, %v188
    %v190 = vrot.slane %v92, %v189
    %v191 = vsel %vm135, %v190, %v186
    %v192 = vlaneseq
    %v193 = vshrl.u32 %v192, 7
    %v194 = vsub.s32 %v137, %v193
    %v195 = vrot.slane %v95, %v194
    %v196 = vsel %vm142, %v195, %v191
    %v197 = vlaneseq
    %v198 = vshrl.u32 %v197, 7
    %v199 = vsub.s32 %v118, %v198
    %v200 = vrot.slane %v98, %v199
    %v201 = vlaneseq
    %v202 = vshrl.u32 %v201, 7
    %v203 = vsub.s32 %v123, %v202
    %v204 = vrot.slane %v101, %v203
    %v205 = vsel %vm128, %v204, %v200
    %v206 = vlaneseq
    %v207 = vshrl.u32 %v206, 7
    %v208 = vsub.s32 %v130, %v207
    %v209 = vrot.slane %v104, %v208
    %v210 = vsel %vm135, %v209, %v205
    %v211 = vlaneseq
    %v212 = vshrl.u32 %v211, 7
    %v213 = vsub.s32 %v137, %v212
    %v214 = vrot.slane %v107, %v213
    %v215 = vsel %vm142, %v214, %v210
    %v216 = vsel %vm163, %v215, %v196
    %v218 = vmax.f32 %v169, %v216
    %219 = vst.msk [vmem:[#allocation2 + $0x2] sm:$0x3] %vm167, %v218
    // Predicated region
    $region22: #{tpu_custom_call.1} parent=1 // pred_check
      %p220 = pneg %p29
    $region23: #{tpu_custom_call.1} parent=1 // pred_check_branch
      %222 = sbr.rel (%p220) target = $region25
    $region24: #{tpu_custom_call.1} parent=1 // pred_region
      %v223 = vld [vmem:[#allocation2] sm:$0x3]
      %v224 = vmul.f32 %v223, 0.00390625
      %225 = vst.msk [vmem:[#allocation2] sm:$0x3] %vm167, %v224
      %v226 = vld [vmem:[#allocation2] sm:$0xf]
      %v227 = vld [vmem:[%s1] sm:$0xff]
      %v228 = vld [vmem:[%s1 + $0x8] sm:$0xff]
      %v229 = vld [vmem:[%s1 + $0x10] sm:$0xff]
      %v230 = vld [vmem:[%s1 + $0x18] sm:$0xff]
      %vm231 = vcmask 261120
      %v233 = vsel %vm231, %v226, 0
      %235 = vmatprep.subr.mxu0 0.0
      %236 = vmatpush1.msra.mxu0 0.0
      %237 = vmatprep.subr.mxu0 0.0
      %238 = vmatpush1.msra.mxu0 0.0
      %239 = vmatprep.subr.mxu0 0.0
      %240 = vmatpush1.msra.mxu0 0.0
      %241 = vmatprep.subr.mxu0 0.0
      %242 = vmatpush1.msra.mxu0 0.0
      %243 = vmatprep.subr.mxu0 0.0
      %244 = vmatpush1.msra.mxu0 0.0
      %245 = vmatprep.subr.mxu0 0.0
      %246 = vmatpush1.msra.mxu0 0.0
      %247 = vmatprep.subr.mxu0 0.0
      %248 = vmatpush1.msra.mxu0 0.0
      %249 = vmatprep.subr.mxu0 0.0
      %250 = vmatpush1.msra.mxu0 0.0
      %251 = vmatprep.subr.mxu0 0.0
      %252 = vmatpush1.msra.mxu0 0.0
      %253 = vmatprep.subr.mxu0 0.0
      %254 = vmatpush1.msra.mxu0 0.0
      %255 = vmatprep.subr.mxu0 0.0
      %256 = vmatpush1.msra.mxu0 0.0
      %257 = vmatprep.subr.mxu0 0.0
      %258 = vmatpush1.msra.mxu0 0.0
      %259 = vmatprep.subr.mxu0 0.0
      %260 = vmatpush1.msra.mxu0 %v230
      %261 = vmatprep.subr.mxu0 0.0
      %262 = vmatpush1.msra.mxu0 %v229
      %263 = vmatprep.subr.mxu0 0.0
      %264 = vmatpush1.msra.mxu0 %v228
      %265 = vmatprep.subr.mxu0 0.0
      %266 = vmatpush1.msra.mxu0 %v227
      %267 = vmatprep.subr.mxu0 0.0
      %268 = vmatpush2.msra.mxu0 0.0
      %269 = vmatprep.subr.mxu0 0.0
      %270 = vmatpush2.msra.mxu0 0.0
      %271 = vmatprep.subr.mxu0 0.0
      %272 = vmatpush2.msra.mxu0 0.0
      %273 = vmatprep.subr.mxu0 0.0
      %274 = vmatpush2.msra.mxu0 0.0
      %275 = vmatprep.subr.mxu0 0.0
      %276 = vmatpush2.msra.mxu0 0.0
      %277 = vmatprep.subr.mxu0 0.0
      %278 = vmatpush2.msra.mxu0 0.0
      %279 = vmatprep.subr.mxu0 0.0
      %280 = vmatpush2.msra.mxu0 0.0
      %281 = vmatprep.subr.mxu0 0.0
      %282 = vmatpush2.msra.mxu0 0.0
      %283 = vmatprep.subr.mxu0 0.0
      %284 = vmatpush2.msra.mxu0 0.0
      %285 = vmatprep.subr.mxu0 0.0
      %286 = vmatpush2.msra.mxu0 0.0
      %287 = vmatprep.subr.mxu0 0.0
      %288 = vmatpush2.msra.mxu0 0.0
      %289 = vmatprep.subr.mxu0 0.0
      %290 = vmatpush2.msra.mxu0 0.0
      %291 = vmatprep.subr.mxu0 0.0
      %292 = vmatpush2.msra.mxu0 0.0
      %293 = vmatprep.subr.mxu0 0.0
      %294 = vmatpush2.msra.mxu0 0.0
      %295 = vmatprep.subr.mxu0 0.0
      %296 = vmatpush2.msra.mxu0 0.0
      %297 = vmatprep.subr.mxu0 0.0
      %298 = vmatpush2.msra.mxu0 0.0
      %299 = vmatprep.mubr.f32.mxu0 0.0
      %300 = vmatmul.mubr.f32.gmra.mxu0 %v233
      %v301 = vpop.f32.mrf.mxu0
      %v302 = vadd.f32 0.0, %v301
      %v303 = vpop.f32.mrf.mxu0
      %304 = vdwg.mxu0
      %v305 = vmax.f32 %v302, 0.0
      %v306 = vld [vmem:[%s2] sm:$0x3]
      %vm307 = vcmask 15360
      %v309 = vsel %vm307, %v305, 0
      %vm311 = vcmask 1041408
      %v313 = vsel %vm311, %v306, 0
      %315 = vmatprep.subr.mxu0 0.0
      %316 = vmatpush1.msra.mxu0 0.0
      %317 = vmatprep.subr.mxu0 0.0
      %318 = vmatpush1.msra.mxu0 0.0
      %319 = vmatprep.subr.mxu0 0.0
      %320 = vmatpush1.msra.mxu0 0.0
      %321 = vmatprep.subr.mxu0 0.0
      %322 = vmatpush1.msra.mxu0 0.0
      %323 = vmatprep.subr.mxu0 0.0
      %324 = vmatpush1.msra.mxu0 0.0
      %325 = vmatprep.subr.mxu0 0.0
      %326 = vmatpush1.msra.mxu0 0.0
      %327 = vmatprep.subr.mxu0 0.0
      %328 = vmatpush1.msra.mxu0 0.0
      %329 = vmatprep.subr.mxu0 0.0
      %330 = vmatpush1.msra.mxu0 0.0
      %331 = vmatprep.subr.mxu0 0.0
      %332 = vmatpush1.msra.mxu0 0.0
      %333 = vmatprep.subr.mxu0 0.0
      %334 = vmatpush1.msra.mxu0 0.0
      %335 = vmatprep.subr.mxu0 0.0
      %336 = vmatpush1.msra.mxu0 0.0
      %337 = vmatprep.subr.mxu0 0.0
      %338 = vmatpush1.msra.mxu0 0.0
      %339 = vmatprep.subr.mxu0 0.0
      %340 = vmatpush1.msra.mxu0 0.0
      %341 = vmatprep.subr.mxu0 0.0
      %342 = vmatpush1.msra.mxu0 0.0
      %343 = vmatprep.subr.mxu0 0.0
      %344 = vmatpush1.msra.mxu0 0.0
      %345 = vmatprep.subr.mxu0 0.0
      %346 = vmatpush1.msra.mxu0 %v313
      %347 = vmatprep.subr.mxu0 0.0
      %348 = vmatpush2.msra.mxu0 0.0
      %349 = vmatprep.subr.mxu0 0.0
      %350 = vmatpush2.msra.mxu0 0.0
      %351 = vmatprep.subr.mxu0 0.0
      %352 = vmatpush2.msra.mxu0 0.0
      %353 = vmatprep.subr.mxu0 0.0
      %354 = vmatpush2.msra.mxu0 0.0
      %355 = vmatprep.subr.mxu0 0.0
      %356 = vmatpush2.msra.mxu0 0.0
      %357 = vmatprep.subr.mxu0 0.0
      %358 = vmatpush2.msra.mxu0 0.0
      %359 = vmatprep.subr.mxu0 0.0
      %360 = vmatpush2.msra.mxu0 0.0
      %361 = vmatprep.subr.mxu0 0.0
      %362 = vmatpush2.msra.mxu0 0.0
      %363 = vmatprep.subr.mxu0 0.0
      %364 = vmatpush2.msra.mxu0 0.0
      %365 = vmatprep.subr.mxu0 0.0
      %366 = vmatpush2.msra.mxu0 0.0
      %367 = vmatprep.subr.mxu0 0.0
      %368 = vmatpush2.msra.mxu0 0.0
      %369 = vmatprep.subr.mxu0 0.0
      %370 = vmatpush2.msra.mxu0 0.0
      %371 = vmatprep.subr.mxu0 0.0
      %372 = vmatpush2.msra.mxu0 0.0
      %373 = vmatprep.subr.mxu0 0.0
      %374 = vmatpush2.msra.mxu0 0.0
      %375 = vmatprep.subr.mxu0 0.0
      %376 = vmatpush2.msra.mxu0 0.0
      %377 = vmatprep.subr.mxu0 0.0
      %378 = vmatpush2.msra.mxu0 0.0
      %379 = vmatprep.mubr.f32.mxu0 0.0
      %380 = vmatmul.mubr.f32.gmra.mxu0 %v309
      %v381 = vpop.f32.mrf.mxu0
      %v382 = vadd.f32 0.0, %v381
      %v383 = vpop.f32.mrf.mxu0
      %384 = vdwg.mxu0
      %v386 = vrot.slane %v382, 2
      %v388 = vadd.f32 %v382, %v386
      %v389 = vmul.f32 %v388, 0.5
      %v390 = vtanh.pop %v389
      %v391 = vadd.f32 %v390, 1.0
      %v392 = vmul.f32 %v391, 0.5
      %v395 = vunpack.c.l.s4 1966171168
      %v396 = vunpack.c.0.s8 %v395
      %v397 = vlaneseq
      %v398 = vshrl.u32 %v397, 7
      %v399 = vsub.s32 %v396, %v398
      %v400 = vrot.slane %v392, %v399
      %v401 = vcombine.high %v400, %v400
      %v403 = vunpack.c.l.s4 1966171168
      %v404 = vunpack.c.0.s8 %v403
      %v405 = vlaneseq
      %v406 = vshrl.u32 %v405, 7
      %v407 = vsub.s32 %v404, %v406
      %v408 = vrot.slane %v400, %v407
      %v410 = vunpack.c.l.s4 1966171168
      %v411 = vunpack.c.0.s8 %v410
      %v412 = vlaneseq
      %v413 = vshrl.u32 %v412, 7
      %v414 = vsub.s32 %v411, %v413
      %v415 = vrot.slane %v401, %v414
      %vm418 = vcmask 253952
      %419 = vst.msk [vmem:[#allocation6] sm:$0x1] %vm418, %v408
      %420 = vst.msk [vmem:[#allocation6 + $0x1] sm:$0x1] %vm418, %v415
    $region25: #{tpu_custom_call.1} parent=1 // pred_fallthru
      _
    // Predicated region
    $region26: #{tpu_custom_call.1} parent=1 // pred_check
      _
    $region27: #{tpu_custom_call.1} parent=1 // pred_check_branch
      %422 = sbr.rel (0) target = $region29
    $region28: #{tpu_custom_call.1} parent=1 // pred_region
      %s424 = ssub.s32 32, 32
      %425 = vsyncadd [#allocation5], %s424
      %s426 = sshll.u32 [#allocation6], 4
      %s427 = int_to_ptr.vmem [resolvable:$true] %s426
      %432 = dma.vmem_to_hbm [thread:$0]  %s427, 32, %s3, [#allocation5], 16, 16, 1
    $region29: #{tpu_custom_call.1} parent=1 // pred_fallthru
      _
    // Predicated region
    $region30: #{tpu_custom_call.1} parent=1 // pred_check
      _
    $region31: #{tpu_custom_call.1} parent=1 // pred_check_branch
      %434 = sbr.rel (0) target = $region33
    $region32: #{tpu_custom_call.1} parent=1 // pred_region
      %435 = dma.done [#allocation5], 32
    $region33: #{tpu_custom_call.1} parent=1 // pred_fallthru
      _
    %436 = vsyncpa [#allocation4], 1
    %437 = vsyncpa [#allocation5], 1

</llo_original>
